<compile_context>
chip_gen: v7x
topology: tpu7x:2x2x1
jax: 0.10.0
libtpu: 0.0.40
codegen_flags: <defaults>
</compile_context>

<pallas_src>
import math
import functools

import numpy as np
import jax
import jax.numpy as jnp
from jax.experimental import pallas as pl
from jax.experimental.pallas import tpu as pltpu


# ---------------------------------------------------------------------------
# Kernel
# ---------------------------------------------------------------------------
def _pe_kernel(seed_ref, x_ref, rowa_ref, rowb_ref, o_ref, *,
               tile_r, width, p_dropout, training, use_hw_prng):
    """One grid step: add sinusoidal PE to a (1, tile_r, width) block.

    Input is a folded, lane-dense view (B, R, W), W = fold * d_model.  For
    folded element (r, c) the PE value is sin(r * rowa[c] + rowb[c]); the
    (1, W) row tables bake in per-channel frequency, the +pi/2 phase for odd
    (cos) channels and the intra-fold position offset, so only ONE
    transcendental is evaluated per element.
    """
    j = pl.program_id(1)

    # Global folded-row index for this tile (sublane iota; rows << 2^24 so the
    # f32 representation is exact).
    row = (j * tile_r
           + jax.lax.broadcasted_iota(jnp.int32, (tile_r, width), 0)
           ).astype(jnp.float32)
    angle = row * rowa_ref[...] + rowb_ref[...]
    pe = jnp.sin(angle)                               # one EUP op / element

    y = x_ref[...].astype(jnp.float32) + pe[None, :, :]

    if training and p_dropout > 0.0:
        keep_scale = jnp.float32(1.0 / (1.0 - p_dropout))
        thresh31 = min(int(p_dropout * (2.0 ** 31)), 2 ** 31 - 1)

        if use_hw_prng:
            # Hardware PRNG: per-step seed so every (batch, row-tile) block
            # gets an independent, deterministic mask.
            pltpu.prng_seed(seed_ref[0], pl.program_id(0), j)
            raw = pltpu.prng_random_bits((tile_r, width))
        else:
            # Portable counter-hash fallback (non-TPU backends / interpret).
            base = (pl.program_id(0) * pl.num_programs(1) + j) * (tile_r * width)
            flat = (base
                    + jax.lax.broadcasted_iota(jnp.int32, (tile_r, width), 0) * width
                    + jax.lax.broadcasted_iota(jnp.int32, (tile_r, width), 1))
            h = flat.astype(jnp.uint32) ^ seed_ref[0].astype(jnp.uint32)
            h = (h ^ (h >> 16)) * jnp.uint32(0x7FEB352D)
            h = (h ^ (h >> 15)) * jnp.uint32(0x846CA68B)
            raw = h ^ (h >> 16)

        # Clear the sign bit and compare in [0, 2^31): identical behavior for
        # int32 / uint32 lowerings of the compare on every TPU generation.
        dt = raw.dtype
        bits = raw & jnp.array(0x7FFFFFFF, dtype=dt)
        keep = bits >= jnp.array(thresh31, dtype=dt)
        y = jnp.where(keep[None, :, :], y * keep_scale, jnp.float32(0.0))

    o_ref[...] = y.astype(o_ref.dtype)


# ---------------------------------------------------------------------------
# Wrapper helpers
# ---------------------------------------------------------------------------
def _choose_tile_rows(R, W, itemsize, block_bytes, batch):
    """Row tile: largest multiple of 8 fitting in `block_bytes`, with a cdiv
    grid (no divisibility requirement).  Capped so the parallel grid has at
    least 2 steps when possible (v7x has 2 TensorCores per chip)."""
    bytes_per_row = max(1, W * itemsize)
    max_rows = max(1, block_bytes // bytes_per_row)
    if max_rows >= R:
        tile = R                                   # whole folded sequence
    else:
        tile = max(8, (max_rows // 8) * 8)
    # Guarantee >= 2 grid steps when the shape allows it.
    if batch * pl.cdiv(R, tile) < 2 and R > 8:
        tile = max(8, ((pl.cdiv(R, 2) + 7) // 8) * 8)
    tile = min(tile, R)
    if tile != R and tile % 8 != 0:                # (8, 128) sublane rule
        tile = max(8, (tile // 8) * 8)
    return tile


# ---------------------------------------------------------------------------
# Public entry point
# ---------------------------------------------------------------------------
def positional_encoding(x, *, p_dropout=0.1, training=False, seed=0,
                        block_bytes=4 * 1024 * 1024):
    """Equivalent to PositionalEncoding(d_model=D, dropout=p_dropout)(x) for
    x of shape (batch, seq, d_model).  Dropout is applied only when
    training=True (nn.Dropout eval semantics otherwise)."""
    B, S, D = x.shape
    assert D % 2 == 0, "d_model must be even (as the PyTorch module assumes)"

    # Lane-dense folding: merge `fold` consecutive sequence rows into the lane
    # dim so the last dim is a multiple of 128 (unmasked vector stores).  If S
    # is not a multiple of `fold`, pad the sequence and slice the result.
    fold = 1 if D % 128 == 0 else 128 // math.gcd(D, 128)
    S_pad = ((S + fold - 1) // fold) * fold
    xp = x if S_pad == S else jnp.pad(x, ((0, 0), (0, S_pad - S), (0, 0)))
    R, W = S_pad // fold, fold * D
    xr = xp.reshape(B, R, W)

    # Per-(folded)-channel tables, shape (1, W) f32:
    #   angle(r, c) = pos * div + phase  with  pos = r*fold + c//D
    #              = r * (fold*div)  +  ((c//D)*div + phase)
    c2 = np.arange(W)
    ch = c2 % D
    q = c2 // D
    div = np.exp((ch // 2).astype(np.float64) * (-2.0 * math.log(10000.0) / D))
    phase = (ch % 2).astype(np.float64) * (math.pi / 2.0)   # odd channels -> cos
    rowa = (fold * div)[None, :].astype(np.float32)
    rowb = (q * div + phase)[None, :].astype(np.float32)

    itemsize = jnp.dtype(x.dtype).itemsize
    tile_r = _choose_tile_rows(R, W, itemsize, block_bytes, B)
    grid = (B, pl.cdiv(R, tile_r))

    # Double-buffered in + out = 4 x block, plus a little slack for the tables
    # and internal scratch; capped under v7x's 64 MiB physical VMEM.
    block_nbytes = tile_r * W * itemsize
    vmem_limit = int(min(48 * 2 ** 20, max(16 * 2 ** 20, 4 * block_nbytes + 2 * 2 ** 20)))

    use_hw_prng = bool(training) and p_dropout > 0.0 and jax.default_backend() == "tpu"

    kernel = functools.partial(
        _pe_kernel, tile_r=tile_r, width=W,
        p_dropout=float(p_dropout), training=bool(training),
        use_hw_prng=use_hw_prng)

    seed_arr = jnp.asarray([seed], dtype=jnp.int32)

    out = pl.pallas_call(
        kernel,
        out_shape=jax.ShapeDtypeStruct((B, R, W), x.dtype),
        grid_spec=pltpu.PrefetchScalarGridSpec(
            num_scalar_prefetch=1,                         # dropout seed -> SMEM
            grid=grid,
            in_specs=[
                pl.BlockSpec((1, tile_r, W), lambda b, j, seed: (b, j, 0)),
                pl.BlockSpec((1, W), lambda b, j, seed: (0, 0)),   # rowa
                pl.BlockSpec((1, W), lambda b, j, seed: (0, 0)),   # rowb
            ],
            out_specs=pl.BlockSpec((1, tile_r, W), lambda b, j, seed: (b, j, 0)),
        ),
        compiler_params=pltpu.CompilerParams(
            dimension_semantics=("parallel", "parallel"),
            vmem_limit_bytes=vmem_limit),
    )(seed_arr, xr, jnp.asarray(rowa), jnp.asarray(rowb))

    out = out.reshape(B, S_pad, D)
    return out[:, :S, :] if S_pad != S else out


# ---------------------------------------------------------------------------
# Pure-JAX reference (PyTorch forward in eval mode)
# ---------------------------------------------------------------------------
def _reference(x):
    B, S, D = x.shape
    position = jnp.arange(S, dtype=jnp.float32)[:, None]
    div_term = jnp.exp(jnp.arange(0, D, 2, dtype=jnp.float32)
                       * (-math.log(10000.0) / D))
    pe = jnp.zeros((S, D), jnp.float32)
    pe = pe.at[:, 0::2].set(jnp.sin(position * div_term))
    pe = pe.at[:, 1::2].set(jnp.cos(position * div_term))
    return (x.astype(jnp.float32) + pe[None, :, :]).astype(x.dtype)


if __name__ == "__main__":
    key = jax.random.PRNGKey(0)
    k1, k2, k3 = jax.random.split(key, 3)

    # Case 1: d_model < 128 -> folded to a 128-wide lane-dense view (fold=4).
    B, S, D = 2, 64, 32
    x = jax.random.normal(k1, (B, S, D), dtype=jnp.float32)
    out = jax.block_until_ready(positional_encoding(x, p_dropout=0.1, training=False))
    ref = _reference(x)
    assert out.shape == x.shape and out.dtype == x.dtype
    assert jnp.allclose(out, ref, atol=2e-4, rtol=2e-4), "mismatch vs reference (case 1)"

    # Case 2: multi-tile cdiv grid with a partial last row-tile (R=20, tile=8).
    B2, S2, D2 = 1, 40, 64
    x2 = jax.random.normal(k2, (B2, S2, D2), dtype=jnp.float32)
    out2 = jax.block_until_ready(
        positional_encoding(x2, p_dropout=0.1, training=False, block_bytes=4096))
    assert jnp.allclose(out2, _reference(x2), atol=2e-4, rtol=2e-4), \
        "mismatch vs reference (case 2)"

    # Case 3: sequence padded up to a multiple of the fold factor (S=20, fold=8).
    B3, S3, D3 = 2, 20, 48
    x3 = jax.random.normal(k3, (B3, S3, D3), dtype=jnp.float32)
    out3 = jax.block_until_ready(positional_encoding(x3, training=False))
    assert out3.shape == x3.shape
    assert jnp.allclose(out3, _reference(x3), atol=2e-4, rtol=2e-4), \
        "mismatch vs reference (case 3)"

    # Case 4: training path (inverted dropout via the on-chip PRNG on TPU).
    out_tr = jax.block_until_ready(
        positional_encoding(x, p_dropout=0.1, training=True, seed=123))
    assert out_tr.shape == x.shape
    assert bool(jnp.all(jnp.isfinite(out_tr)))

    print("KERNEL_OK")
</pallas_src>

<mosaic_0001>
module attributes {stable_mosaic.version = 11 : i64} {
  func.func @_pe_kernel(%arg0: i32, %arg1: i32, %arg2: memref<1xi32, #tpu.memory_space<smem>>, %arg3: memref<1x16x128xf32, #tpu.memory_space<vmem>>, %arg4: memref<1x128xf32, #tpu.memory_space<vmem>>, %arg5: memref<1x128xf32, #tpu.memory_space<vmem>>, %arg6: memref<1x16x128xf32, #tpu.memory_space<vmem>>) attributes {dimension_semantics = [#tpu.dimension_semantics<parallel>, #tpu.dimension_semantics<parallel>], iteration_bounds = array<i64: 2, 1>, scalar_prefetch = 1 : i64, scratch_operands = 0 : i64, tpu.core_type = #tpu.core_type<tc>, window_params = [{transform_indices = @transform_0, window_bounds = array<i64: 1, 16, 128>}, {pipeline_mode = #tpu.pipeline_mode<synchronous>, transform_indices = @transform_1, window_bounds = array<i64: 1, 128>}, {pipeline_mode = #tpu.pipeline_mode<synchronous>, transform_indices = @transform_2, window_bounds = array<i64: 1, 128>}, {transform_indices = @transform_3, window_bounds = array<i64: 1, 16, 128>}]} {
    %c16_i32 = arith.constant 16 : i32
    %0 = arith.muli %arg1, %c16_i32 : i32
    %1 = tpu.iota {dimensions = array<i32: 0>} : vector<16x128xi32>
    %2 = vector.broadcast %0 : i32 to vector<16x128xi32>
    %3 = arith.addi %2, %1 : vector<16x128xi32>
    %4 = arith.sitofp %3 : vector<16x128xi32> to vector<16x128xf32>
    %c0 = arith.constant 0 : index
    %c0_0 = arith.constant 0 : index
    %5 = vector.load %arg4[%c0, %c0_0] : memref<1x128xf32, #tpu.memory_space<vmem>>, vector<1x128xf32>
    %6 = vector.broadcast %5 : vector<1x128xf32> to vector<16x128xf32>
    %7 = arith.mulf %4, %6 : vector<16x128xf32>
    %c0_1 = arith.constant 0 : index
    %c0_2 = arith.constant 0 : index
    %8 = vector.load %arg5[%c0_1, %c0_2] : memref<1x128xf32, #tpu.memory_space<vmem>>, vector<1x128xf32>
    %9 = vector.broadcast %8 : vector<1x128xf32> to vector<16x128xf32>
    %10 = arith.addf %7, %9 : vector<16x128xf32>
    %11 = math.sin %10 : vector<16x128xf32>
    %c0_3 = arith.constant 0 : index
    %c0_4 = arith.constant 0 : index
    %c0_5 = arith.constant 0 : index
    %12 = vector.load %arg3[%c0_3, %c0_4, %c0_5] : memref<1x16x128xf32, #tpu.memory_space<vmem>>, vector<1x16x128xf32>
    %13 = vector.shape_cast %11 : vector<16x128xf32> to vector<1x16x128xf32>
    %14 = arith.addf %12, %13 : vector<1x16x128xf32>
    %c0_6 = arith.constant 0 : index
    %c0_7 = arith.constant 0 : index
    %c0_8 = arith.constant 0 : index
    %15 = vector.load %arg6[%c0_6, %c0_7, %c0_8] : memref<1x16x128xf32, #tpu.memory_space<vmem>>, vector<1x16x128xf32>
    tpu.vector_store %arg6[%c0_6, %c0_7, %c0_8], %14 {strides = array<i32>} : memref<1x16x128xf32, #tpu.memory_space<vmem>>, vector<1x16x128xf32>,
    return
  }
  func.func @transform_0(%arg0: i32, %arg1: i32, %arg2: memref<1xi32, #tpu.memory_space<smem>>) -> (i32, i32, i32) {
    %c0_i32 = arith.constant 0 : i32
    %c0_i32_0 = arith.constant 0 : i32
    return %arg0, %arg1, %c0_i32 : i32, i32, i32
  }
  func.func @transform_1(%arg0: i32, %arg1: i32, %arg2: memref<1xi32, #tpu.memory_space<smem>>) -> (i32, i32) {
    %c0_i32 = arith.constant 0 : i32
    %c0_i32_0 = arith.constant 0 : i32
    %c0_i32_1 = arith.constant 0 : i32
    return %c0_i32, %c0_i32_0 : i32, i32
  }
  func.func @transform_2(%arg0: i32, %arg1: i32, %arg2: memref<1xi32, #tpu.memory_space<smem>>) -> (i32, i32) {
    %c0_i32 = arith.constant 0 : i32
    %c0_i32_0 = arith.constant 0 : i32
    %c0_i32_1 = arith.constant 0 : i32
    return %c0_i32, %c0_i32_0 : i32, i32
  }
  func.func @transform_3(%arg0: i32, %arg1: i32, %arg2: memref<1xi32, #tpu.memory_space<smem>>) -> (i32, i32, i32) {
    %c0_i32 = arith.constant 0 : i32
    %c0_i32_0 = arith.constant 0 : i32
    return %arg0, %arg1, %c0_i32 : i32, i32, i32
  }
}

</mosaic_0001>

<llo_original>
// kernel: tpu_custom_call.1
$region0: #{tpu_custom_call.1}
  #allocation0 [shape = 'u32[]', space=smem, size = 0x4, offset = 0x4, fixed_abs, tag = 'smem constant byte address 0x4 - core index']
  #allocation1 [shape = 'u32[144,128]{1,0:T(1,128)}', space=vmem, size = 0x12000, scoped, tag = 'internal scratch']
  #allocation2 [shape = 's32[1]{0}', space=sflag, size = 0x4, scoped, tag = 'scoped memory for tpu_custom_call.1']
  #allocation3 [shape = 's32[1]{0:T(128)S(6)}', space=smem, size = 0x200, scoped, tag = 'prefetched SMEM operand 0']
  %s0 = inlined_call_operand.<no memory space> [shape: s32[1], index: 0, kind: input, shape index: {}]
  %s1 = inlined_call_operand.hbm [shape: f32[2,16,128], index: 1, kind: input, shape index: {}]
  %s2 = inlined_call_operand.vmem [shape: f32[1,128], index: 2, kind: input, shape index: {}]
  %s3 = inlined_call_operand.vmem [shape: f32[1,128], index: 3, kind: input, shape index: {}]
  %s4 = inlined_call_operand.hbm [shape: f32[2,16,128], index: 4, kind: output, shape index: {}]
  %s5 = sld [smem:[#allocation0]]
  $region49: #{tpu_custom_call.1} parent=0
    _
  %s7 = ssub.s32 1, %s5
  %s8 = scalar_select 0, %s7, %s5
  %9 = sst [smem:[#allocation3]] %s0
  $region1: #{tpu_custom_call.1} parent=0
    #allocation4 [shape = 'u8[16384]{0}', space=vmem, size = 0x4000, scoped, tag = 'input window, operand 1']
    #allocation5 [shape = 's32[2]{0}', space=sflag, size = 0x8, scoped, tag = 'scoped memory for tpu_custom_call.1']
    #allocation6 [shape = 's32[2]{0}', space=sflag, size = 0x8, scoped, tag = 'scoped memory for tpu_custom_call.1']
    #allocation7 [shape = 'u8[16384]{0}', space=vmem, size = 0x4000, scoped, tag = 'output window, operand 0']
    %10 = vsyncpa [#allocation5], 0
    %s11 = scalar_lea.sflag [#allocation5], 1
    %12 = vsyncpa %s11, 0
    %13 = vsyncpa [#allocation6], 0
    %s14 = scalar_lea.sflag [#allocation6], 1
    %15 = vsyncpa %s14, 0
    loop: start=0, step=1, limit=4
    $region2: #{tpu_custom_call.1} parent=1 // loop_pre_header
      _
    $region3: #{tpu_custom_call.1} parent=1 // loop_header
      %s17 = sphi 0, %s21
      %p18 = scmp.ge.s32.totalorder %s17, 4
      %s24 = sphi 0, %s36
      %s25 = sphi 0, %s32
      %s26 = sphi 0, %s24
      %s27 = sphi 0, %s25
      %s28 = sphi 0, %s26
      %s29 = sphi 0, %s27
      %s41 = sphi 0, %s43
      %s44 = sphi 0, %s41
      %s45 = sphi 0, %s44
      %s61 = sphi 0, %s45
      %s65 = sphi 0, %s65
      %s67 = sphi 0, %s65
      %s68 = sphi 0, %s67
      %s82 = sphi 0, %s68
      %s86 = sphi 0, %s86
      %s88 = sphi 0, %s86
      %s89 = sphi 0, %s88
      %s103 = sphi 0, %s89
      %s111 = sphi 0, %s113
      %s114 = sphi 0, %s111
      %s115 = sphi 0, %s114
      %s131 = sphi 0, %s115
    $region4: #{tpu_custom_call.1} parent=1 // loop_header_branch
      %20 = sbr.rel (%p18) target = $region8
    $region5: #{tpu_custom_call.1} parent=1 // loop_body
      %s22 = ssub.s32 %s17, 1
      %s23 = ssub.s32 %s17, 2
      %s30 = sadd.s32 1, %s25
      %p31 = scmp.ge.s32.totalorder %s30, 1
      %s32 = scalar_select %p31, 0, %s30
      %s33 = sadd.s32 1, %s24
      %s34 = scalar_select %p31, %s33, %s24
      %p35 = scmp.ge.s32.totalorder %s34, 2
      %s36 = scalar_select %p35, 0, %s34
      %s37 = ssub.s32 %s24, %s36
      %s38 = ssub.s32 %s25, %s32
      %s39 = sor.u32 %s37, %s38
      %p40 = scmp.eq.s32.totalorder %s39, 0
      %s42 = sadd.s32 %s41, 1
      %s43 = scalar_select %p40, %s41, %s42
      %p46 = pneg %p40
      %p47 = scmp.eq.s32.totalorder %s17, 1
      %p48 = por %p46, %p47
      %p49 = scmp.ne.s32.totalorder %s41, %s44
      %p50 = scmp.eq.s32.totalorder %s17, 0
      %p51 = por %p49, %p50
      %p52 = scmp.ne.s32.totalorder %s41, %s44
      %p53 = scmp.eq.s32.totalorder %s22, 1
      %p54 = por %p52, %p53
      %p55 = scmp.ne.s32.totalorder %s44, %s45
      %p56 = scmp.eq.s32.totalorder %s22, 0
      %p57 = por %p55, %p56
      %p58 = scmp.ne.s32.totalorder %s44, %s45
      %p59 = scmp.eq.s32.totalorder %s23, 1
      %p60 = por %p58, %p59
      %p62 = scmp.ne.s32.totalorder %s45, %s61
      %p63 = scmp.eq.s32.totalorder %s23, 0
      %p64 = por %p62, %p63
      %s66 = sadd.s32 %s65, 1
      %p69 = scmp.eq.s32.totalorder %s17, 1
      %p70 = scmp.ne.s32.totalorder %s65, %s67
      %p71 = scmp.eq.s32.totalorder %s17, 0
      %p72 = por %p70, %p71
      %p73 = scmp.ne.s32.totalorder %s65, %s67
      %p74 = scmp.eq.s32.totalorder %s22, 1
      %p75 = por %p73, %p74
      %p76 = scmp.ne.s32.totalorder %s67, %s68
      %p77 = scmp.eq.s32.totalorder %s22, 0
      %p78 = por %p76, %p77
      %p79 = scmp.ne.s32.totalorder %s67, %s68
      %p80 = scmp.eq.s32.totalorder %s23, 1
      %p81 = por %p79, %p80
      %p83 = scmp.ne.s32.totalorder %s68, %s82
      %p84 = scmp.eq.s32.totalorder %s23, 0
      %p85 = por %p83, %p84
      %s87 = sadd.s32 %s86, 1
      %p90 = scmp.eq.s32.totalorder %s17, 1
      %p91 = scmp.ne.s32.totalorder %s86, %s88
      %p92 = scmp.eq.s32.totalorder %s17, 0
      %p93 = por %p91, %p92
      %p94 = scmp.ne.s32.totalorder %s86, %s88
      %p95 = scmp.eq.s32.totalorder %s22, 1
      %p96 = por %p94, %p95
      %p97 = scmp.ne.s32.totalorder %s88, %s89
      %p98 = scmp.eq.s32.totalorder %s22, 0
      %p99 = por %p97, %p98
      %p100 = scmp.ne.s32.totalorder %s88, %s89
      %p101 = scmp.eq.s32.totalorder %s23, 1
      %p102 = por %p100, %p101
      %p104 = scmp.ne.s32.totalorder %s89, %s103
      %p105 = scmp.eq.s32.totalorder %s23, 0
      %p106 = por %p104, %p105
      %s107 = ssub.s32 %s24, %s36
      %s108 = ssub.s32 %s25, %s32
      %s109 = sor.u32 %s107, %s108
      %p110 = scmp.eq.s32.totalorder %s109, 0
      %s112 = sadd.s32 %s111, 1
      %s113 = scalar_select %p110, %s111, %s112
      %p116 = pneg %p110
      %p117 = scmp.eq.s32.totalorder %s17, 1
      %p118 = por %p116, %p117
      %p119 = scmp.ne.s32.totalorder %s111, %s114
      %p120 = scmp.eq.s32.totalorder %s17, 0
      %p121 = por %p119, %p120
      %p122 = scmp.ne.s32.totalorder %s111, %s114
      %p123 = scmp.eq.s32.totalorder %s22, 1
      %p124 = por %p122, %p123
      %p125 = scmp.ne.s32.totalorder %s114, %s115
      %p126 = scmp.eq.s32.totalorder %s22, 0
      %p127 = por %p125, %p126
      %p128 = scmp.ne.s32.totalorder %s114, %s115
      %p129 = scmp.eq.s32.totalorder %s23, 1
      %p130 = por %p128, %p129
      %p132 = scmp.ne.s32.totalorder %s115, %s131
      %p133 = scmp.eq.s32.totalorder %s23, 0
      %p134 = por %p132, %p133
      %p135 = scmp.le.s32.totalorder 1, %s17
      %p136 = scmp.lt.s32.totalorder %s17, 3
      %p137 = pnand %p135, %p136
      %p138 = pneg %p137
      // Predicated region
      $region9: #{tpu_custom_call.1} parent=5 // pred_check
        _
      $region10: #{tpu_custom_call.1} parent=5 // pred_check_branch
        %140 = sbr.rel (%p137) target = $region12
      $region11: #{tpu_custom_call.1} parent=5 // pred_region
        %s141 = ssub.s32 %s17, 1
        // Predicated region
        $region13: #{tpu_custom_call.1} parent=11 // pred_check
          %p142 = pneg %p78
        $region14: #{tpu_custom_call.1} parent=11 // pred_check_branch
          %144 = sbr.rel (%p142) target = $region16
        $region15: #{tpu_custom_call.1} parent=11 // pred_region
          _
        $region16: #{tpu_custom_call.1} parent=11 // pred_fallthru
          _
        // Predicated region
        $region17: #{tpu_custom_call.1} parent=11 // pred_check
          %p145 = pneg %p99
        $region18: #{tpu_custom_call.1} parent=11 // pred_check_branch
          %147 = sbr.rel (%p145) target = $region20
        $region19: #{tpu_custom_call.1} parent=11 // pred_region
          _
        $region20: #{tpu_custom_call.1} parent=11 // pred_fallthru
          _
      $region12: #{tpu_custom_call.1} parent=5 // pred_fallthru
        _
      %p148 = scmp.lt.s32.totalorder %s17, 2
      // Predicated region
      $region21: #{tpu_custom_call.1} parent=5 // pred_check
        %p149 = pneg %p148
      $region22: #{tpu_custom_call.1} parent=5 // pred_check_branch
        %151 = sbr.rel (%p149) target = $region24
      $region23: #{tpu_custom_call.1} parent=5 // pred_region
        // Predicated region
        $region25: #{tpu_custom_call.1} parent=23 // pred_check
          %p152 = pneg %p51
        $region26: #{tpu_custom_call.1} parent=23 // pred_check_branch
          %154 = sbr.rel (%p152) target = $region28
        $region27: #{tpu_custom_call.1} parent=23 // pred_region
          %s155 = sand.u32 %s41, 1
          %s156 = scalar_lea.sflag [#allocation5], %s155
          %s157 = sand.u32 %s41, 1
          %s158 = smul.addr %s157, 16
          %s159 = scalar_lea.vmem [#allocation4], %s158
          %s160 = smul.u32 2, %s25
          %s162 = ssub.s32 256, 256
          %163 = vsyncadd %s156, %s162
          %s164 = smul.addr %s24, 2
          %s165 = sadd.s32 %s160, %s164
          %s166 = smul.addr %s165, 128
          %s167 = scalar_lea.hbm %s1, %s166
          %s168 = sshll.u32 %s159, 4
          %s169 = int_to_ptr.vmem [resolvable:$true] %s168
          %174 = dma.hbm_to_vmem [thread:$0]  %s167, 256, %s169, %s156, 128, 128, 8
        $region28: #{tpu_custom_call.1} parent=23 // pred_fallthru
          _
      $region24: #{tpu_custom_call.1} parent=5 // pred_fallthru
        _
      %p175 = scmp.le.s32.totalorder 1, %s17
      %p176 = scmp.lt.s32.totalorder %s17, 3
      %p177 = pnand %p175, %p176
      %p178 = pneg %p177
      // Predicated region
      $region29: #{tpu_custom_call.1} parent=5 // pred_check
        _
      $region30: #{tpu_custom_call.1} parent=5 // pred_check_branch
        %180 = sbr.rel (%p177) target = $region32
      $region31: #{tpu_custom_call.1} parent=5 // pred_region
        %s181 = ssub.s32 %s17, 1
        %s182 = sand.u32 %s44, 1
        %s183 = scalar_lea.sflag [#allocation5], %s182
        %s184 = sand.u32 %s44, 1
        %s185 = smul.addr %s184, 16
        %s186 = scalar_lea.vmem [#allocation4], %s185
        // Predicated region
        $region33: #{tpu_custom_call.1} parent=31 // pred_check
          %p187 = pneg %p57
        $region34: #{tpu_custom_call.1} parent=31 // pred_check_branch
          %189 = sbr.rel (%p187) target = $region36
        $region35: #{tpu_custom_call.1} parent=31 // pred_region
          %190 = dma.done %s183, 256
        $region36: #{tpu_custom_call.1} parent=31 // pred_fallthru
          _
        %s191 = sand.u32 %s44, 1
        %s192 = scalar_lea.sflag [#allocation5], %s191
        %s193 = sand.u32 %s44, 1
        %s194 = smul.addr %s193, 16
        %s195 = scalar_lea.vmem [#allocation4], %s194
        %p196 = pneg %p57
        %p197 = pneg %p54
        %p198 = pneg %p78
        %p199 = pneg %p75
        %p200 = pneg %p99
        %p201 = pneg %p96
        %p202 = pneg %p127
        %p203 = pneg %p124
        %s204 = sand.u32 %s114, 1
        %s205 = scalar_lea.sflag [#allocation6], %s204
        %s206 = sand.u32 %s114, 1
        %s207 = smul.addr %s206, 16
        %s208 = scalar_lea.vmem [#allocation7], %s207
        %s209 = smul.u32 2, %s27
        %s210 = smul.u32 2, %s27
        %s211 = smul.u32 %s27, 16
        %v212 = vlaneseq
        %v213 = vshrl.u32 %v212, 7
        %v214 = vadd.s32 %v213, 8
        %v215 = vstv %s211
        %v216 = vadd.s32 %v215, %v213
        %v217 = vadd.s32 %v215, %v214
        %v218 = vcvt.s32.f32 %v216
        %v219 = vcvt.s32.f32 %v217
        %v220 = vld [vmem:[%s2] sm:$0x1]
        %v222 = vlaneseq
        %v223 = vshrl.u32 %v222, 7
        %v224 = vsub.s32 0, %v223
        %v225 = vrot.slane %v220, %v224
        %v227 = vmul.f32 %v218, %v225
        %v228 = vmul.f32 %v219, %v225
        %v229 = vld [vmem:[%s3] sm:$0x1]
        %v231 = vlaneseq
        %v232 = vshrl.u32 %v231, 7
        %v233 = vsub.s32 0, %v232
        %v234 = vrot.slane %v229, %v233
        %v236 = vadd.f32 %v227, %v234
        %v237 = vadd.f32 %v228, %v234
        %v238 = vand.u32 2147483647, %v236
        %vm239 = vcmp.le.f32.partialorder %v238, 0.7853982
        %vm240 = vcmp.lt.s32.totalorder %v236, 0
        %v241 = vand.u32 %v236, 2139095040
        %v242 = vshrl.u32 %v241, 23
        %v243 = vsub.s32 %v242, 127
        %v244 = vand.u32 2147483647, %v236
        %v245 = vand.u32 %v244, 8388607
        %v246 = vor.u32 %v245, 8388608
        %v247 = vsub.s32 0, %v246
        %v248 = vadd.s32 %v243, 1
        %vm249 = vcmp.gt.s32.totalorder %v248, 0
        %v250 = vsel %vm249, %v248, 0
        %v251 = vshrl.u32 %v250, 5
        %v252 = vand.u32 %v250, 31
        %v253 = vsub.s32 32, %v252
        %v254 = vshrl.u32 683565275, %v253
        %v255 = vshll.u32 683565275, %v252
        %v256 = vshrl.u32 2475754826, %v253
        %v257 = vor.u32 %v255, %v256
        %v258 = vshll.u32 2475754826, %v252
        %v259 = vshrl.u32 2131351028, %v253
        %v260 = vor.u32 %v258, %v259
        %v261 = vshll.u32 2131351028, %v252
        %v262 = vshrl.u32 2102212464, %v253
        %v263 = vor.u32 %v261, %v262
        %v264 = vshll.u32 2102212464, %v252
        %v265 = vshrl.u32 920167782, %v253
        %v266 = vor.u32 %v264, %v265
        %v267 = vshll.u32 920167782, %v252
        %v268 = vshrl.u32 1326507024, %v253
        %v269 = vor.u32 %v267, %v268
        %vm270 = vcmp.lt.s32.totalorder %v251, 1
        %vm271 = vcmp.lt.s32.totalorder %v251, 2
        %vm272 = vcmp.lt.s32.totalorder %v251, 3
        %vm273 = vcmp.lt.s32.totalorder %v251, 4
        %v274 = vsel %vm270, %v254, %v257
        %v275 = vsel %vm273, %v263, 2102212464
        %v276 = vsel %vm272, %v260, %v275
        %v277 = vsel %vm271, %v274, %v276
        %v278 = vsel %vm270, %v257, %v260
        %v279 = vsel %vm273, %v266, 920167782
        %v280 = vsel %vm272, %v263, %v279
        %v281 = vsel %vm271, %v278, %v280
        %v282 = vsel %vm270, %v260, %v263
        %v283 = vsel %vm273, %v269, 1326507024
        %v284 = vsel %vm272, %v266, %v283
        %v285 = vsel %vm271, %v282, %v284
        %v286 = vshll.u32 %v246, 8
        %v287 = vmul.u32.u64.compose %v286, %v285
        %v288 = vextract.low.u32 %v287
        %v289 = vextract.high.u32 %v287
        %v290 = vmul.u32.u64.compose %v286, %v281
        %v291 = vextract.low.u32 %v290
        %v292 = vextract.high.u32 %v290
        %v293 = vmul.u32 %v286, %v277
        %v294 = vadd.s32 %v289, %v291
        %vm295 = vc.u32 %v289, %v291
        %v296 = vadd.s32 %v292, 1
        %v297 = vsel %vm295, %v296, %v292
        %v298 = vadd.s32 %v293, %v297
        %v299 = vadd.s32 %v298, 536870912
        %v300 = vshrl.u32 %v299, 30
        %v301 = vshll.u32 %v300, 30
        %v302 = vsub.s32 %v298, %v301
        %vm303 = vcmp.lt.s32.totalorder %v302, 0
        %v304 = vsub.s32 0, %v302
        %v305 = vsel %vm303, %v304, %v302
        %v306 = vclz %v305
        %v307 = vsub.s32 %v306, 2
        %vm308 = vcmp.gt.s32.totalorder 0, %v307
        %v309 = vsel %vm308, 0, %v307
        %v310 = vsub.s32 32, %v309
        %v311 = vshll.u32 %v302, %v309
        %v312 = vshrl.u32 %v294, %v310
        %v313 = vor.u32 %v311, %v312
        %v314 = vsub.s32 4294967266, %v309
        %v315 = vadd.s32 %v314, 127
        %v316 = vshll.u32 %v315, 23
        %v317 = vor.u32 4788187, %v316
        %v318 = vand.u32 2147483647, %v317
        %v320 = vcvt.s32.f32 %v313
        %v321 = vmul.f32 %v320, %v318
        %v322 = vxor.u32 %v321, 2147483648
        %v323 = vsel %vm240, %v322, %v321
        %v324 = vsub.s32 4, %v300
        %v325 = vsel %vm240, %v324, %v300
        %v326 = vsel %vm239, %v236, %v323
        %v327 = vsel %vm239, 0, %v325
        %v328 = vcosq.f32.pop %v326
        %v329 = vsinq.f32.pop %v326
        %vm330 = vweird.f32 %v236
        %v331 = vadd.s32 %v327, 3
        %v332 = vand.u32 %v331, 3
        %vm333 = vcmp.lt.s32.totalorder %v332, 2
        %vm334 = vcmp.eq.s32.totalorder %v332, 0
        %v335 = vxor.u32 %v329, 2147483648
        %v336 = vsel %vm334, %v328, %v335
        %vm337 = vcmp.eq.s32.totalorder %v332, 2
        %v338 = vxor.u32 %v328, 2147483648
        %v339 = vsel %vm337, %v338, %v329
        %v340 = vsel %vm333, %v336, %v339
        %v341 = vsel %vm330, nan, %v340
        %v342 = vand.u32 2147483647, %v237
        %vm343 = vcmp.le.f32.partialorder %v342, 0.7853982
        %vm344 = vcmp.lt.s32.totalorder %v237, 0
        %v345 = vand.u32 %v237, 2139095040
        %v346 = vshrl.u32 %v345, 23
        %v347 = vsub.s32 %v346, 127
        %v348 = vand.u32 2147483647, %v237
        %v349 = vand.u32 %v348, 8388607
        %v350 = vor.u32 %v349, 8388608
        %v351 = vsub.s32 0, %v350
        %v352 = vadd.s32 %v347, 1
        %vm353 = vcmp.gt.s32.totalorder %v352, 0
        %v354 = vsel %vm353, %v352, 0
        %v355 = vshrl.u32 %v354, 5
        %v356 = vand.u32 %v354, 31
        %v357 = vsub.s32 32, %v356
        %v358 = vshrl.u32 683565275, %v357
        %v359 = vshll.u32 683565275, %v356
        %v360 = vshrl.u32 2475754826, %v357
        %v361 = vor.u32 %v359, %v360
        %v362 = vshll.u32 2475754826, %v356
        %v363 = vshrl.u32 2131351028, %v357
        %v364 = vor.u32 %v362, %v363
        %v365 = vshll.u32 2131351028, %v356
        %v366 = vshrl.u32 2102212464, %v357
        %v367 = vor.u32 %v365, %v366
        %v368 = vshll.u32 2102212464, %v356
        %v369 = vshrl.u32 920167782, %v357
        %v370 = vor.u32 %v368, %v369
        %v371 = vshll.u32 920167782, %v356
        %v372 = vshrl.u32 1326507024, %v357
        %v373 = vor.u32 %v371, %v372
        %vm374 = vcmp.lt.s32.totalorder %v355, 1
        %vm375 = vcmp.lt.s32.totalorder %v355, 2
        %vm376 = vcmp.lt.s32.totalorder %v355, 3
        %vm377 = vcmp.lt.s32.totalorder %v355, 4
        %v378 = vsel %vm374, %v358, %v361
        %v379 = vsel %vm377, %v367, 2102212464
        %v380 = vsel %vm376, %v364, %v379
        %v381 = vsel %vm375, %v378, %v380
        %v382 = vsel %vm374, %v361, %v364
        %v383 = vsel %vm377, %v370, 920167782
        %v384 = vsel %vm376, %v367, %v383
        %v385 = vsel %vm375, %v382, %v384
        %v386 = vsel %vm374, %v364, %v367
        %v387 = vsel %vm377, %v373, 1326507024
        %v388 = vsel %vm376, %v370, %v387
        %v389 = vsel %vm375, %v386, %v388
        %v390 = vshll.u32 %v350, 8
        %v391 = vmul.u32.u64.compose %v390, %v389
        %v392 = vextract.low.u32 %v391
        %v393 = vextract.high.u32 %v391
        %v394 = vmul.u32.u64.compose %v390, %v385
        %v395 = vextract.low.u32 %v394
        %v396 = vextract.high.u32 %v394
        %v397 = vmul.u32 %v390, %v381
        %v398 = vadd.s32 %v393, %v395
        %vm399 = vc.u32 %v393, %v395
        %v400 = vadd.s32 %v396, 1
        %v401 = vsel %vm399, %v400, %v396
        %v402 = vadd.s32 %v397, %v401
        %v403 = vadd.s32 %v402, 536870912
        %v404 = vshrl.u32 %v403, 30
        %v405 = vshll.u32 %v404, 30
        %v406 = vsub.s32 %v402, %v405
        %vm407 = vcmp.lt.s32.totalorder %v406, 0
        %v408 = vsub.s32 0, %v406
        %v409 = vsel %vm407, %v408, %v406
        %v410 = vclz %v409
        %v411 = vsub.s32 %v410, 2
        %vm412 = vcmp.gt.s32.totalorder 0, %v411
        %v413 = vsel %vm412, 0, %v411
        %v414 = vsub.s32 32, %v413
        %v415 = vshll.u32 %v406, %v413
        %v416 = vshrl.u32 %v398, %v414
        %v417 = vor.u32 %v415, %v416
        %v418 = vsub.s32 4294967266, %v413
        %v419 = vadd.s32 %v418, 127
        %v420 = vshll.u32 %v419, 23
        %v421 = vor.u32 4788187, %v420
        %v422 = vand.u32 2147483647, %v421
        %v424 = vcvt.s32.f32 %v417
        %v425 = vmul.f32 %v424, %v422
        %v426 = vxor.u32 %v425, 2147483648
        %v427 = vsel %vm344, %v426, %v425
        %v428 = vsub.s32 4, %v404
        %v429 = vsel %vm344, %v428, %v404
        %v430 = vsel %vm343, %v237, %v427
        %v431 = vsel %vm343, 0, %v429
        %v432 = vcosq.f32.pop %v430
        %v433 = vsinq.f32.pop %v430
        %vm434 = vweird.f32 %v237
        %v435 = vadd.s32 %v431, 3
        %v436 = vand.u32 %v435, 3
        %vm437 = vcmp.lt.s32.totalorder %v436, 2
        %vm438 = vcmp.eq.s32.totalorder %v436, 0
        %v439 = vxor.u32 %v433, 2147483648
        %v440 = vsel %vm438, %v432, %v439
        %vm441 = vcmp.eq.s32.totalorder %v436, 2
        %v442 = vxor.u32 %v432, 2147483648
        %v443 = vsel %vm441, %v442, %v433
        %v444 = vsel %vm437, %v440, %v443
        %v445 = vsel %vm434, nan, %v444
        %v446 = vld [vmem:[%s186] sm:$0xff]
        %v447 = vld [vmem:[%s186 + $0x8] sm:$0xff]
        %v448 = vadd.f32 %v446, %v341
        %v449 = vadd.f32 %v447, %v445
        %450 = vst [vmem:[%s208] sm:$0xff] %v448
        %451 = vst [vmem:[%s208 + $0x8] sm:$0xff] %v449
        %s452 = sand.u32 %s114, 1
        %s453 = scalar_lea.sflag [#allocation6], %s452
        %s454 = sand.u32 %s114, 1
        %s455 = smul.addr %s454, 16
        %s456 = scalar_lea.vmem [#allocation7], %s455
        // Predicated region
        $region37: #{tpu_custom_call.1} parent=31 // pred_check
          %p457 = pneg %p124
        $region38: #{tpu_custom_call.1} parent=31 // pred_check_branch
          %459 = sbr.rel (%p457) target = $region40
        $region39: #{tpu_custom_call.1} parent=31 // pred_region
          %s460 = smul.u32 2, %s27
          %s462 = ssub.s32 256, 256
          %463 = vsyncadd %s453, %s462
          %s464 = smul.addr %s26, 2
          %s465 = sadd.s32 %s460, %s464
          %s466 = smul.addr %s465, 128
          %s467 = scalar_lea.hbm %s4, %s466
          %s468 = sshll.u32 %s456, 4
          %s469 = int_to_ptr.vmem [resolvable:$true] %s468
          %474 = dma.vmem_to_hbm [thread:$0]  %s469, 256, %s467, %s453, 128, 128, 8
        $region40: #{tpu_custom_call.1} parent=31 // pred_fallthru
          _
      $region32: #{tpu_custom_call.1} parent=5 // pred_fallthru
        _
      %p475 = scmp.le.s32.totalorder 2, %s17
      // Predicated region
      $region41: #{tpu_custom_call.1} parent=5 // pred_check
        %p476 = pneg %p475
      $region42: #{tpu_custom_call.1} parent=5 // pred_check_branch
        %478 = sbr.rel (%p476) target = $region44
      $region43: #{tpu_custom_call.1} parent=5 // pred_region
        %s479 = ssub.s32 %s17, 2
        // Predicated region
        $region45: #{tpu_custom_call.1} parent=43 // pred_check
          %p480 = pneg %p130
        $region46: #{tpu_custom_call.1} parent=43 // pred_check_branch
          %482 = sbr.rel (%p480) target = $region48
        $region47: #{tpu_custom_call.1} parent=43 // pred_region
          %s483 = sand.u32 %s115, 1
          %s484 = scalar_lea.sflag [#allocation6], %s483
          %s485 = sand.u32 %s115, 1
          %s486 = smul.addr %s485, 16
          %s487 = scalar_lea.vmem [#allocation7], %s486
          %488 = dma.done %s484, 256
        $region48: #{tpu_custom_call.1} parent=43 // pred_fallthru
          _
      $region44: #{tpu_custom_call.1} parent=5 // pred_fallthru
        _
    $region6: #{tpu_custom_call.1} parent=1 // loop_footer
      %s21 = sadd.s32 1, %s17
    $region7: #{tpu_custom_call.1} parent=1 // loop_footer_branch
      %16 = sbr.rel target = $region3
    $region8: #{tpu_custom_call.1} parent=1 // loop_exit
      _
    %489 = vsyncpa [#allocation5], 1
    %s490 = scalar_lea.sflag [#allocation5], 1
    %491 = vsyncpa %s490, 1
    %492 = vsyncpa [#allocation6], 1
    %s493 = scalar_lea.sflag [#allocation6], 1
    %494 = vsyncpa %s493, 1

</llo_original>
